<compile_context>
chip_gen: v6e
topology: v6e:2x2x1
jax: 0.10.0
libtpu: 0.0.40
codegen_flags: <defaults>
</compile_context>

<pallas_src>
import functools

import jax
import jax.numpy as jnp
from jax.experimental import pallas as pl
from jax.experimental.pallas import tpu as pltpu

_LANES = 128


def _pick_tile_rows(n_rows, itemsize, max_tile=2048):
    """Biggest legal sublane tile: full extent if it fits, else a large
    multiple of the minimum sublane count for the dtype (8 rows for 4-byte)."""
    sub = 8 * max(1, 4 // itemsize)
    if n_rows <= max_tile:
        return n_rows                       # single full-extent block (always legal)
    return max(sub, (max_tile // sub) * sub)


def _coordinator_kernel_packed(x_ref, last_ref, learn_ref, gmat_ref, o_ref, *,
                               num_params, feat):
    """Lane-dense tile: each vector row holds 128 // feat original node rows."""
    out = x_ref[...]                                   # (tile, lanes)
    gmat = gmat_ref[...]                               # (lanes, lanes) bf16, hoisted
    thresh = jnp.float32(feat) - 0.5
    # P is tiny (one coordinator per graph); a static unrolled loop preserves
    # the exact sequential PyTorch semantics (later params are compared
    # against already-replaced rows).
    # TODO(synk): for large P switch to lax.fori_loop(..., unroll=True) with
    # dynamic last_ref[pl.ds(j, 1)] indexing to bound code size / vreg churn.
    for j in range(num_params):
        snap = last_ref[pl.ds(j, 1), :]                # (1, lanes)
        repl = learn_ref[pl.ds(j, 1), :]               # (1, lanes)
        eq = (out == snap).astype(jnp.bfloat16)        # (tile, lanes)
        # Per-node-row "all features equal" reduction on the MXU: counts of
        # matching features, already broadcast within each feature group.
        cnt = jnp.dot(eq, gmat, preferred_element_type=jnp.float32)
        out = jnp.where(cnt >= thresh, repl, out)
    o_ref[...] = out


def _coordinator_kernel_plain(x_ref, last_ref, learn_ref, o_ref, *, num_params):
    """Fallback layout for F > 128: feature dim stays on the lane axis."""
    out = x_ref[...]
    for j in range(num_params):
        snap = last_ref[pl.ds(j, 1), :]
        repl = learn_ref[pl.ds(j, 1), :]
        match = jnp.all(out == snap, axis=-1, keepdims=True)
        out = jnp.where(match, repl, out)
    o_ref[...] = out


def _run(kernel, x2d, const_inputs, tile, flops):
    n_rows, width = x2d.shape
    itemsize = jnp.dtype(x2d.dtype).itemsize
    in_specs = [pl.BlockSpec((tile, width), lambda i: (i, 0))]
    in_specs += [pl.BlockSpec(tuple(c.shape), lambda i: (0, 0))
                 for c in const_inputs]
    bytes_accessed = 2 * n_rows * width * itemsize + sum(
        int(c.size) * jnp.dtype(c.dtype).itemsize for c in const_inputs)
    return pl.pallas_call(
        kernel,
        out_shape=jax.ShapeDtypeStruct((n_rows, width), x2d.dtype),
        grid_spec=pltpu.PrefetchScalarGridSpec(
            num_scalar_prefetch=0,
            grid=(pl.cdiv(n_rows, tile),),
            in_specs=in_specs,
            out_specs=pl.BlockSpec((tile, width), lambda i: (i, 0)),
        ),
        compiler_params=pltpu.CompilerParams(
            dimension_semantics=("parallel",)),
        cost_estimate=pl.CostEstimate(
            flops=flops, transcendentals=0, bytes_accessed=bytes_accessed),
    )(x2d, *const_inputs)


def _reference_forward(x, last_params, learn_params):
    """Pure-JAX loop replicating the sequential PyTorch semantics (also used
    as the epilogue for the < pack-row tail of the packed path)."""
    out = x
    for j in range(last_params.shape[0]):
        match = jnp.all(out == last_params[j][None, :], axis=-1, keepdims=True)
        out = jnp.where(match, learn_params[j][None, :], out)
    return out


def graph_coordinator_forward(x, last_params, learn_params, *, max_tile_rows=2048):
    """Pallas implementation of GraphCoordinator.forward on node features x.

    x:            (N, F) node features (already containing coordinator rows,
                  as produced by add_learnable_features_with_no_grad).
    last_params:  (P, F) snapshot params (last_updated_param).
    learn_params: (P, F) current learnable params (learnable_param).
    """
    n, feat = x.shape
    p, feat_p = last_params.shape
    assert feat_p == feat and learn_params.shape == (p, feat)
    if p == 0 or n == 0:
        return x
    itemsize = jnp.dtype(x.dtype).itemsize
    # TODO(synk): torch.equal compares in the original/promoted dtype; casting
    # params down to x.dtype could merge distinct snapshots if dtypes differ.
    last_params = last_params.astype(x.dtype)
    learn_params = learn_params.astype(x.dtype)

    if feat <= _LANES:
        # Lane-dense path: pack floor(128 / F) node rows per vector row via a
        # free row-major reshape (no jnp.pad); the < pack-row tail (if any) is
        # handled with a trivial jnp epilogue.
        pack = _LANES // feat
        lanes = pack * feat
        n_main = (n // pack) * pack
        parts = []
        if n_main > 0:
            rows = n_main // pack
            x_main = x[:n_main].reshape(rows, lanes)
            last_packed = jnp.tile(last_params, (1, pack))
            learn_packed = jnp.tile(learn_params, (1, pack))
            groups = jnp.arange(lanes, dtype=jnp.int32) // feat
            gmat = (groups[:, None] == groups[None, :]).astype(jnp.bfloat16)
            tile = _pick_tile_rows(rows, itemsize, max_tile_rows)
            kernel = functools.partial(
                _coordinator_kernel_packed, num_params=p, feat=feat)
            flops = 2 * rows * lanes * lanes * p
            out_main = _run(kernel, x_main, (last_packed, learn_packed, gmat),
                            tile, flops)
            parts.append(out_main.reshape(n_main, feat))
        if n_main < n:
            # TODO(synk): the leading-row slice + concatenate copies only occur
            # when N % pack != 0; the structural fix is a donated input with
            # conditional manual write-back, not done here.
            parts.append(_reference_forward(x[n_main:], last_params, learn_params))
        return parts[0] if len(parts) == 1 else jnp.concatenate(parts, axis=0)

    # F > 128: feature dim stays on the (multi-vreg) lane axis.
    tile = _pick_tile_rows(n, itemsize, max_tile_rows)
    kernel = functools.partial(_coordinator_kernel_plain, num_params=p)
    flops = 2 * n * feat * p
    return _run(kernel, x, (last_params, learn_params), tile, flops)


if __name__ == "__main__":
    key = jax.random.PRNGKey(0)

    # --- Small demo consistent with the module ------------------------------
    num_node_features = 32          # F
    num_graph_coordinators = 4      # P (one coordinator row per graph)
    num_original_nodes = 12         # 2 graphs x 6 nodes

    k_param, k_nodes, k_big = jax.random.split(key, 3)
    last_params = jax.random.normal(
        k_param, (num_graph_coordinators, num_node_features), dtype=jnp.float32)
    learn_params = last_params + 1.0    # shifted so replacement is observable

    orig_x = jax.random.normal(
        k_nodes, (num_original_nodes, num_node_features), dtype=jnp.float32)
    # add_learnable_features_with_no_grad: append coordinator rows to x.
    x = jnp.concatenate([orig_x, last_params], axis=0)          # (16, 32)
    # The PyG Batch.batch vector only drives traversal order in the PyTorch
    # loop and has no effect on outputs, so it is not a kernel input.
    # TODO(synk): PyTorch swaps tensor *identity* (nn.Parameter) to re-enable
    # autograd through matched rows; only value-level semantics are
    # reproducible in a functional JAX kernel.

    out = jax.block_until_ready(
        graph_coordinator_forward(x, last_params, learn_params))
    ref = _reference_forward(x, last_params, learn_params)
    assert out.shape == x.shape and out.dtype == x.dtype
    assert jnp.array_equal(out, ref), "Pallas output mismatch vs reference"
    assert jnp.array_equal(out[num_original_nodes:], learn_params)
    assert jnp.array_equal(out[:num_original_nodes], orig_x)

    # --- Medium case: multi-row grid, N % pack != 0 tail path ----------------
    n_big = 2503                    # not a multiple of pack=4
    x_big = jax.random.normal(k_big, (n_big, num_node_features), jnp.float32)
    x_big = x_big.at[jnp.array([7, 500, 1300, 2502])].set(last_params)
    out_big = jax.block_until_ready(
        graph_coordinator_forward(x_big, last_params, learn_params))
    assert jnp.array_equal(
        out_big, _reference_forward(x_big, last_params, learn_params))

    # --- F that does not divide 128 (packed to 96 dense lanes) ---------------
    feat2, p2, n2 = 48, 3, 20
    k_p2, k_x2 = jax.random.split(k_big)
    last2 = jax.random.normal(k_p2, (p2, feat2), jnp.float32)
    learn2 = last2 * 2.0
    x2 = jnp.concatenate(
        [jax.random.normal(k_x2, (n2 - p2, feat2), jnp.float32), last2], axis=0)
    out2 = jax.block_until_ready(graph_coordinator_forward(x2, last2, learn2))
    assert jnp.array_equal(out2, _reference_forward(x2, last2, learn2))

    # --- F > 128 fallback path ------------------------------------------------
    feat3, p3, n3 = 160, 2, 12
    k_p3, k_x3 = jax.random.split(k_x2)
    last3 = jax.random.normal(k_p3, (p3, feat3), jnp.float32)
    learn3 = last3 - 1.0
    x3 = jnp.concatenate(
        [jax.random.normal(k_x3, (n3 - p3, feat3), jnp.float32), last3], axis=0)
    out3 = jax.block_until_ready(graph_coordinator_forward(x3, last3, learn3))
    assert jnp.array_equal(out3, _reference_forward(x3, last3, learn3))

    print("KERNEL_OK")
</pallas_src>

<mosaic_0001>
module attributes {stable_mosaic.version = 11 : i64} {
  func.func @_coordinator_kernel_packed(%arg0: i32, %arg1: memref<4x128xf32, #tpu.memory_space<vmem>>, %arg2: memref<4x128xf32, #tpu.memory_space<vmem>>, %arg3: memref<4x128xf32, #tpu.memory_space<vmem>>, %arg4: memref<128x128xbf16, #tpu.memory_space<vmem>>, %arg5: memref<4x128xf32, #tpu.memory_space<vmem>>) attributes {dimension_semantics = [#tpu.dimension_semantics<parallel>], iteration_bounds = array<i64: 1>, scalar_prefetch = 0 : i64, scratch_operands = 0 : i64, tpu.core_type = #tpu.core_type<tc>, window_params = [{transform_indices = @transform_0, window_bounds = array<i64: 4, 128>}, {pipeline_mode = #tpu.pipeline_mode<synchronous>, transform_indices = @transform_1, window_bounds = array<i64: 4, 128>}, {pipeline_mode = #tpu.pipeline_mode<synchronous>, transform_indices = @transform_2, window_bounds = array<i64: 4, 128>}, {pipeline_mode = #tpu.pipeline_mode<synchronous>, transform_indices = @transform_3, window_bounds = array<i64: 128, 128>}, {transform_indices = @transform_4, window_bounds = array<i64: 4, 128>}]} {
    %c0 = arith.constant 0 : index
    %c0_0 = arith.constant 0 : index
    %0 = vector.load %arg1[%c0, %c0_0] : memref<4x128xf32, #tpu.memory_space<vmem>>, vector<4x128xf32>
    %c0_1 = arith.constant 0 : index
    %c0_2 = arith.constant 0 : index
    %1 = vector.load %arg4[%c0_1, %c0_2] : memref<128x128xbf16, #tpu.memory_space<vmem>>, vector<128x128xbf16>
    %cst = arith.constant 3.200000e+01 : f32
    %cst_3 = arith.constant 5.000000e-01 : f32
    %2 = arith.subf %cst, %cst_3 : f32
    %c0_4 = arith.constant 0 : index
    %c0_5 = arith.constant 0 : index
    %3 = vector.load %arg2[%c0_4, %c0_5] : memref<4x128xf32, #tpu.memory_space<vmem>>, vector<1x128xf32>
    %c0_6 = arith.constant 0 : index
    %c0_7 = arith.constant 0 : index
    %4 = vector.load %arg3[%c0_6, %c0_7] : memref<4x128xf32, #tpu.memory_space<vmem>>, vector<1x128xf32>
    %5 = vector.broadcast %3 : vector<1x128xf32> to vector<4x128xf32>
    %6 = arith.cmpf oeq, %0, %5 : vector<4x128xf32>
    %7 = arith.extui %6 : vector<4x128xi1> to vector<4x128xi32>
    %8 = arith.sitofp %7 : vector<4x128xi32> to vector<4x128xf32>
    %9 = arith.truncf %8 : vector<4x128xf32> to vector<4x128xbf16>
    %cst_8 = arith.constant dense<0.000000e+00> : vector<4x128xf32>
    %10 = tpu.matmul %9, %1, %cst_8 {dimension_numbers = #tpu.dot_dimension_numbers<[1], [0], [0], [1], [0, 0, 1, 1], [], []>} : vector<4x128xbf16>, vector<128x128xbf16>, vector<4x128xf32> -> vector<4x128xf32>
    %11 = vector.broadcast %2 : f32 to vector<4x128xf32>
    %12 = arith.cmpf oge, %10, %11 : vector<4x128xf32>
    %13 = vector.shape_cast %4 : vector<1x128xf32> to vector<1x128xf32>
    %14 = vector.broadcast %13 : vector<1x128xf32> to vector<4x128xf32>
    %15 = arith.select %12, %14, %0 : vector<4x128xi1>, vector<4x128xf32>
    %c1 = arith.constant 1 : index
    %c0_9 = arith.constant 0 : index
    %16 = vector.load %arg2[%c1, %c0_9] : memref<4x128xf32, #tpu.memory_space<vmem>>, vector<1x128xf32>
    %c1_10 = arith.constant 1 : index
    %c0_11 = arith.constant 0 : index
    %17 = vector.load %arg3[%c1_10, %c0_11] : memref<4x128xf32, #tpu.memory_space<vmem>>, vector<1x128xf32>
    %18 = vector.broadcast %16 : vector<1x128xf32> to vector<4x128xf32>
    %19 = arith.cmpf oeq, %15, %18 : vector<4x128xf32>
    %20 = arith.extui %19 : vector<4x128xi1> to vector<4x128xi32>
    %21 = arith.sitofp %20 : vector<4x128xi32> to vector<4x128xf32>
    %22 = arith.truncf %21 : vector<4x128xf32> to vector<4x128xbf16>
    %cst_12 = arith.constant dense<0.000000e+00> : vector<4x128xf32>
    %23 = tpu.matmul %22, %1, %cst_12 {dimension_numbers = #tpu.dot_dimension_numbers<[1], [0], [0], [1], [0, 0, 1, 1], [], []>} : vector<4x128xbf16>, vector<128x128xbf16>, vector<4x128xf32> -> vector<4x128xf32>
    %24 = vector.broadcast %2 : f32 to vector<4x128xf32>
    %25 = arith.cmpf oge, %23, %24 : vector<4x128xf32>
    %26 = vector.shape_cast %17 : vector<1x128xf32> to vector<1x128xf32>
    %27 = vector.broadcast %26 : vector<1x128xf32> to vector<4x128xf32>
    %28 = arith.select %25, %27, %15 : vector<4x128xi1>, vector<4x128xf32>
    %c2 = arith.constant 2 : index
    %c0_13 = arith.constant 0 : index
    %29 = vector.load %arg2[%c2, %c0_13] : memref<4x128xf32, #tpu.memory_space<vmem>>, vector<1x128xf32>
    %c2_14 = arith.constant 2 : index
    %c0_15 = arith.constant 0 : index
    %30 = vector.load %arg3[%c2_14, %c0_15] : memref<4x128xf32, #tpu.memory_space<vmem>>, vector<1x128xf32>
    %31 = vector.broadcast %29 : vector<1x128xf32> to vector<4x128xf32>
    %32 = arith.cmpf oeq, %28, %31 : vector<4x128xf32>
    %33 = arith.extui %32 : vector<4x128xi1> to vector<4x128xi32>
    %34 = arith.sitofp %33 : vector<4x128xi32> to vector<4x128xf32>
    %35 = arith.truncf %34 : vector<4x128xf32> to vector<4x128xbf16>
    %cst_16 = arith.constant dense<0.000000e+00> : vector<4x128xf32>
    %36 = tpu.matmul %35, %1, %cst_16 {dimension_numbers = #tpu.dot_dimension_numbers<[1], [0], [0], [1], [0, 0, 1, 1], [], []>} : vector<4x128xbf16>, vector<128x128xbf16>, vector<4x128xf32> -> vector<4x128xf32>
    %37 = vector.broadcast %2 : f32 to vector<4x128xf32>
    %38 = arith.cmpf oge, %36, %37 : vector<4x128xf32>
    %39 = vector.shape_cast %30 : vector<1x128xf32> to vector<1x128xf32>
    %40 = vector.broadcast %39 : vector<1x128xf32> to vector<4x128xf32>
    %41 = arith.select %38, %40, %28 : vector<4x128xi1>, vector<4x128xf32>
    %c3 = arith.constant 3 : index
    %c0_17 = arith.constant 0 : index
    %42 = vector.load %arg2[%c3, %c0_17] : memref<4x128xf32, #tpu.memory_space<vmem>>, vector<1x128xf32>
    %c3_18 = arith.constant 3 : index
    %c0_19 = arith.constant 0 : index
    %43 = vector.load %arg3[%c3_18, %c0_19] : memref<4x128xf32, #tpu.memory_space<vmem>>, vector<1x128xf32>
    %44 = vector.broadcast %42 : vector<1x128xf32> to vector<4x128xf32>
    %45 = arith.cmpf oeq, %41, %44 : vector<4x128xf32>
    %46 = arith.extui %45 : vector<4x128xi1> to vector<4x128xi32>
    %47 = arith.sitofp %46 : vector<4x128xi32> to vector<4x128xf32>
    %48 = arith.truncf %47 : vector<4x128xf32> to vector<4x128xbf16>
    %cst_20 = arith.constant dense<0.000000e+00> : vector<4x128xf32>
    %49 = tpu.matmul %48, %1, %cst_20 {dimension_numbers = #tpu.dot_dimension_numbers<[1], [0], [0], [1], [0, 0, 1, 1], [], []>} : vector<4x128xbf16>, vector<128x128xbf16>, vector<4x128xf32> -> vector<4x128xf32>
    %50 = vector.broadcast %2 : f32 to vector<4x128xf32>
    %51 = arith.cmpf oge, %49, %50 : vector<4x128xf32>
    %52 = vector.shape_cast %43 : vector<1x128xf32> to vector<1x128xf32>
    %53 = vector.broadcast %52 : vector<1x128xf32> to vector<4x128xf32>
    %54 = arith.select %51, %53, %41 : vector<4x128xi1>, vector<4x128xf32>
    %c0_21 = arith.constant 0 : index
    %c0_22 = arith.constant 0 : index
    %55 = vector.load %arg5[%c0_21, %c0_22] : memref<4x128xf32, #tpu.memory_space<vmem>>, vector<4x128xf32>
    tpu.vector_store %arg5[%c0_21, %c0_22], %54 {strides = array<i32>} : memref<4x128xf32, #tpu.memory_space<vmem>>, vector<4x128xf32>,
    return
  }
  func.func @transform_0(%arg0: i32) -> (i32, i32) {
    %c0_i32 = arith.constant 0 : i32
    %c0_i32_0 = arith.constant 0 : i32
    return %arg0, %c0_i32 : i32, i32
  }
  func.func @transform_1(%arg0: i32) -> (i32, i32) {
    %c0_i32 = arith.constant 0 : i32
    %c0_i32_0 = arith.constant 0 : i32
    %c0_i32_1 = arith.constant 0 : i32
    return %c0_i32, %c0_i32_0 : i32, i32
  }
  func.func @transform_2(%arg0: i32) -> (i32, i32) {
    %c0_i32 = arith.constant 0 : i32
    %c0_i32_0 = arith.constant 0 : i32
    %c0_i32_1 = arith.constant 0 : i32
    return %c0_i32, %c0_i32_0 : i32, i32
  }
  func.func @transform_3(%arg0: i32) -> (i32, i32) {
    %c0_i32 = arith.constant 0 : i32
    %c0_i32_0 = arith.constant 0 : i32
    %c0_i32_1 = arith.constant 0 : i32
    return %c0_i32, %c0_i32_0 : i32, i32
  }
  func.func @transform_4(%arg0: i32) -> (i32, i32) {
    %c0_i32 = arith.constant 0 : i32
    %c0_i32_0 = arith.constant 0 : i32
    return %arg0, %c0_i32 : i32, i32
  }
}

</mosaic_0001>

<llo_original>
// kernel: tpu_custom_call.1
$region0: #{tpu_custom_call.1}
  #allocation0 [shape = 'u32[]', space=smem, size = 0x4, offset = 0x4, fixed_abs, tag = 'smem constant byte address 0x4 - core index']
  #allocation1 [shape = 'u32[144,128]{1,0:T(1,128)}', space=vmem, size = 0x12000, scoped, tag = 'internal scratch']
  %s0 = inlined_call_operand.hbm [shape: f32[4,128], index: 0, kind: input, shape index: {}]
  %s1 = inlined_call_operand.hbm [shape: f32[4,128], index: 1, kind: input, shape index: {}]
  %s2 = inlined_call_operand.hbm [shape: f32[4,128], index: 2, kind: input, shape index: {}]
  %s3 = inlined_call_operand.hbm [shape: bf16[128,128], index: 3, kind: input, shape index: {}]
  %s4 = inlined_call_operand.hbm [shape: f32[4,128], index: 4, kind: output, shape index: {}]
  %s5 = sld [smem:[#allocation0]]
  $region42: #{tpu_custom_call.1} parent=0
    _
  %s7 = ssub.s32 1, %s5
  %s8 = scalar_select 0, %s7, %s5
  $region1: #{tpu_custom_call.1} parent=0
    #allocation2 [shape = 'u8[2048]{0}', space=vmem, size = 0x800, scoped, tag = 'input window, operand 0, single buffered']
    #allocation3 [shape = 's32[1]{0}', space=sflag, size = 0x4, scoped, tag = 'scoped memory for tpu_custom_call.1']
    #allocation4 [shape = 's32[1]{0}', space=sflag, size = 0x4, scoped, tag = 'scoped memory for tpu_custom_call.1']
    #allocation5 [shape = 'u8[2048]{0}', space=vmem, size = 0x800, scoped, tag = 'input window, operand 1, single buffered']
    #allocation6 [shape = 's32[1]{0}', space=sflag, size = 0x4, scoped, tag = 'scoped memory for tpu_custom_call.1']
    #allocation7 [shape = 'u8[2048]{0}', space=vmem, size = 0x800, scoped, tag = 'input window, operand 2, single buffered']
    #allocation8 [shape = 'u8[32768]{0}', space=vmem, size = 0x8000, scoped, tag = 'input window, operand 3, single buffered']
    #allocation9 [shape = 's32[1]{0}', space=sflag, size = 0x4, scoped, tag = 'scoped memory for tpu_custom_call.1']
    #allocation10 [shape = 'u8[2048]{0}', space=vmem, size = 0x800, scoped, tag = 'output window, operand 0, single buffered']
    %9 = vsyncpa [#allocation3], 0
    %10 = vsyncpa [#allocation6], 0
    %11 = vsyncpa [#allocation9], 0
    %12 = vsyncpa [#allocation4], 0
    // Predicated region
    $region2: #{tpu_custom_call.1} parent=1 // pred_check
      _
    $region3: #{tpu_custom_call.1} parent=1 // pred_check_branch
      %14 = sbr.rel (0) target = $region5
    $region4: #{tpu_custom_call.1} parent=1 // pred_region
      %s16 = ssub.s32 64, 64
      %17 = vsyncadd [#allocation3], %s16
      %s19 = sshll.u32 [#allocation2], 4
      %s20 = int_to_ptr.vmem [resolvable:$true] %s19
      %22 = dma.hbm_to_vmem [thread:$0]  %s0, 64, %s20, [#allocation3]
    $region5: #{tpu_custom_call.1} parent=1 // pred_fallthru
      _
    // Predicated region
    $region6: #{tpu_custom_call.1} parent=1 // pred_check
      _
    $region7: #{tpu_custom_call.1} parent=1 // pred_check_branch
      %24 = sbr.rel (0) target = $region9
    $region8: #{tpu_custom_call.1} parent=1 // pred_region
      %s26 = ssub.s32 64, 64
      %27 = vsyncadd [#allocation6], %s26
      %s29 = sshll.u32 [#allocation5], 4
      %s30 = int_to_ptr.vmem [resolvable:$true] %s29
      %32 = dma.hbm_to_vmem [thread:$0]  %s1, 64, %s30, [#allocation6]
    $region9: #{tpu_custom_call.1} parent=1 // pred_fallthru
      _
    // Predicated region
    $region10: #{tpu_custom_call.1} parent=1 // pred_check
      _
    $region11: #{tpu_custom_call.1} parent=1 // pred_check_branch
      %34 = sbr.rel (0) target = $region13
    $region12: #{tpu_custom_call.1} parent=1 // pred_region
      %s36 = ssub.s32 64, 64
      %37 = vsyncadd [#allocation6], %s36
      %s39 = sshll.u32 [#allocation7], 4
      %s40 = int_to_ptr.vmem [resolvable:$true] %s39
      %42 = dma.hbm_to_vmem [thread:$0]  %s2, 64, %s40, [#allocation6]
    $region13: #{tpu_custom_call.1} parent=1 // pred_fallthru
      _
    // Predicated region
    $region14: #{tpu_custom_call.1} parent=1 // pred_check
      _
    $region15: #{tpu_custom_call.1} parent=1 // pred_check_branch
      %44 = sbr.rel (0) target = $region17
    $region16: #{tpu_custom_call.1} parent=1 // pred_region
      %s46 = ssub.s32 1024, 1024
      %47 = vsyncadd [#allocation9], %s46
      %s48 = sshll.u32 [#allocation8], 4
      %s49 = int_to_ptr.vmem [resolvable:$true] %s48
      %54 = dma.hbm_to_vmem [thread:$0]  %s3, 1024, %s49, [#allocation9], 64, 64, 4
    $region17: #{tpu_custom_call.1} parent=1 // pred_fallthru
      _
    // Predicated region
    $region18: #{tpu_custom_call.1} parent=1 // pred_check
      _
    $region19: #{tpu_custom_call.1} parent=1 // pred_check_branch
      %56 = sbr.rel (0) target = $region21
    $region20: #{tpu_custom_call.1} parent=1 // pred_region
      %57 = dma.done [#allocation3], 64
    $region21: #{tpu_custom_call.1} parent=1 // pred_fallthru
      _
    // Predicated region
    $region22: #{tpu_custom_call.1} parent=1 // pred_check
      _
    $region23: #{tpu_custom_call.1} parent=1 // pred_check_branch
      %59 = sbr.rel (0) target = $region25
    $region24: #{tpu_custom_call.1} parent=1 // pred_region
      %60 = dma.done [#allocation6], 64
    $region25: #{tpu_custom_call.1} parent=1 // pred_fallthru
      _
    // Predicated region
    $region26: #{tpu_custom_call.1} parent=1 // pred_check
      _
    $region27: #{tpu_custom_call.1} parent=1 // pred_check_branch
      %62 = sbr.rel (0) target = $region29
    $region28: #{tpu_custom_call.1} parent=1 // pred_region
      %63 = dma.done [#allocation6], 64
    $region29: #{tpu_custom_call.1} parent=1 // pred_fallthru
      _
    // Predicated region
    $region30: #{tpu_custom_call.1} parent=1 // pred_check
      _
    $region31: #{tpu_custom_call.1} parent=1 // pred_check_branch
      %65 = sbr.rel (0) target = $region33
    $region32: #{tpu_custom_call.1} parent=1 // pred_region
      %66 = dma.done [#allocation9], 1024
    $region33: #{tpu_custom_call.1} parent=1 // pred_fallthru
      _
    %v68 = vld [vmem:[#allocation2] sm:$0xf]
    %v69 = vld [vmem:[#allocation8] sm:$0xf]
    %v70 = vld [vmem:[#allocation8 + $0x4] sm:$0xf]
    %v71 = vld [vmem:[#allocation8 + $0x8] sm:$0xf]
    %v72 = vld [vmem:[#allocation8 + $0xc] sm:$0xf]
    %v73 = vld [vmem:[#allocation8 + $0x10] sm:$0xf]
    %v74 = vld [vmem:[#allocation8 + $0x14] sm:$0xf]
    %v75 = vld [vmem:[#allocation8 + $0x18] sm:$0xf]
    %v76 = vld [vmem:[#allocation8 + $0x1c] sm:$0xf]
    %v77 = vld [vmem:[#allocation8 + $0x20] sm:$0xf]
    %v78 = vld [vmem:[#allocation8 + $0x24] sm:$0xf]
    %v79 = vld [vmem:[#allocation8 + $0x28] sm:$0xf]
    %v80 = vld [vmem:[#allocation8 + $0x2c] sm:$0xf]
    %v81 = vld [vmem:[#allocation8 + $0x30] sm:$0xf]
    %v82 = vld [vmem:[#allocation8 + $0x34] sm:$0xf]
    %v83 = vld [vmem:[#allocation8 + $0x38] sm:$0xf]
    %v84 = vld [vmem:[#allocation8 + $0x3c] sm:$0xf]
    %v85 = vld [vmem:[#allocation5] sm:$0x1]
    %v86 = vld [vmem:[#allocation7] sm:$0x1]
    %v87 = vlaneseq
    %v88 = vshrl.u32 %v87, 7
    %v89 = vsub.s32 0, %v88
    %v90 = vrot.slane %v85, %v89
    %vm91 = vcmp.eq.f32.partialorder %v68, %v90
    %v92 = vsel %vm91, 1, 0
    %v93 = vcvt.s32.f32 %v92
    %v94 = vpack.c.bf16 %v93, %v93
    %v111 = vunpack.c.l.b16 %v69
    %v112 = vunpack.c.l.b16 %v70
    %v113 = vunpack.c.l.b16 %v71
    %v114 = vunpack.c.l.b16 %v72
    %v115 = vunpack.c.l.b16 %v73
    %v116 = vunpack.c.l.b16 %v74
    %v117 = vunpack.c.l.b16 %v75
    %v118 = vunpack.c.l.b16 %v76
    %v119 = vunpack.c.l.b16 %v77
    %v120 = vunpack.c.l.b16 %v78
    %v121 = vunpack.c.l.b16 %v79
    %v122 = vunpack.c.l.b16 %v80
    %v123 = vunpack.c.l.b16 %v81
    %v124 = vunpack.c.l.b16 %v82
    %v125 = vunpack.c.l.b16 %v83
    %v126 = vunpack.c.l.b16 %v84
    %v127 = vpack.c.b16 %v112, %v111
    %v128 = vpack.c.b16 %v114, %v113
    %v129 = vpack.c.b16 %v116, %v115
    %v130 = vpack.c.b16 %v118, %v117
    %v131 = vpack.c.b16 %v120, %v119
    %v132 = vpack.c.b16 %v122, %v121
    %v133 = vpack.c.b16 %v124, %v123
    %v134 = vpack.c.b16 %v126, %v125
    %143 = vmatprep.subr.bf16.mxu0 0
    %144 = vmatpush1.bf16.msra.mxu0 %v134
    %145 = vmatprep.subr.bf16.mxu0 0
    %146 = vmatpush1.bf16.msra.mxu0 %v133
    %147 = vmatprep.subr.bf16.mxu0 0
    %148 = vmatpush1.bf16.msra.mxu0 %v132
    %149 = vmatprep.subr.bf16.mxu0 0
    %150 = vmatpush1.bf16.msra.mxu0 %v131
    %151 = vmatprep.subr.bf16.mxu0 0
    %152 = vmatpush1.bf16.msra.mxu0 %v130
    %153 = vmatprep.subr.bf16.mxu0 0
    %154 = vmatpush1.bf16.msra.mxu0 %v129
    %155 = vmatprep.subr.bf16.mxu0 0
    %156 = vmatpush1.bf16.msra.mxu0 %v128
    %157 = vmatprep.subr.bf16.mxu0 0
    %158 = vmatpush1.bf16.msra.mxu0 %v127
    %159 = vmatprep.subr.bf16.mxu0 0
    %160 = vmatpush2.bf16.msra.mxu0 0
    %161 = vmatprep.subr.bf16.mxu0 0
    %162 = vmatpush2.bf16.msra.mxu0 0
    %163 = vmatprep.subr.bf16.mxu0 0
    %164 = vmatpush2.bf16.msra.mxu0 0
    %165 = vmatprep.subr.bf16.mxu0 0
    %166 = vmatpush2.bf16.msra.mxu0 0
    %167 = vmatprep.subr.bf16.mxu0 0
    %168 = vmatpush2.bf16.msra.mxu0 0
    %169 = vmatprep.subr.bf16.mxu0 0
    %170 = vmatpush2.bf16.msra.mxu0 0
    %171 = vmatprep.subr.bf16.mxu0 0
    %172 = vmatpush2.bf16.msra.mxu0 0
    %173 = vmatprep.subr.bf16.mxu0 0
    %174 = vmatpush2.bf16.msra.mxu0 0
    %175 = vmatprep.mubr.bf16.mxu0 0
    %176 = vmatmul.mubr.bf16.gmra.mxu0 %v94
    %v177 = vpop.f32.mrf.mxu0
    %v178 = vadd.f32 0.0, %v177
    %v179 = vpop.f32.mrf.mxu0
    %v180 = vpop.f32.mrf.mxu0
    %v181 = vpop.f32.mrf.mxu0
    %182 = vdwg.mxu0
    %vm183 = vcmp.ge.f32.partialorder %v178, 31.5
    %v184 = vlaneseq
    %v185 = vshrl.u32 %v184, 7
    %v186 = vsub.s32 0, %v185
    %v187 = vrot.slane %v86, %v186
    %v188 = vsel %vm183, %v187, %v68
    %v189 = vld [vmem:[#allocation5 + $0x1] sm:$0x1]
    %v190 = vld [vmem:[#allocation7 + $0x1] sm:$0x1]
    %v191 = vlaneseq
    %v192 = vshrl.u32 %v191, 7
    %v193 = vsub.s32 0, %v192
    %v194 = vrot.slane %v189, %v193
    %vm195 = vcmp.eq.f32.partialorder %v188, %v194
    %v196 = vsel %vm195, 1, 0
    %v197 = vcvt.s32.f32 %v196
    %v198 = vpack.c.bf16 %v197, %v197
    %199 = vmatprep.subr.bf16.mxu0 0
    %200 = vmatpush1.bf16.msra.mxu0 %v134
    %201 = vmatprep.subr.bf16.mxu0 0
    %202 = vmatpush1.bf16.msra.mxu0 %v133
    %203 = vmatprep.subr.bf16.mxu0 0
    %204 = vmatpush1.bf16.msra.mxu0 %v132
    %205 = vmatprep.subr.bf16.mxu0 0
    %206 = vmatpush1.bf16.msra.mxu0 %v131
    %207 = vmatprep.subr.bf16.mxu0 0
    %208 = vmatpush1.bf16.msra.mxu0 %v130
    %209 = vmatprep.subr.bf16.mxu0 0
    %210 = vmatpush1.bf16.msra.mxu0 %v129
    %211 = vmatprep.subr.bf16.mxu0 0
    %212 = vmatpush1.bf16.msra.mxu0 %v128
    %213 = vmatprep.subr.bf16.mxu0 0
    %214 = vmatpush1.bf16.msra.mxu0 %v127
    %215 = vmatprep.subr.bf16.mxu0 0
    %216 = vmatpush2.bf16.msra.mxu0 0
    %217 = vmatprep.subr.bf16.mxu0 0
    %218 = vmatpush2.bf16.msra.mxu0 0
    %219 = vmatprep.subr.bf16.mxu0 0
    %220 = vmatpush2.bf16.msra.mxu0 0
    %221 = vmatprep.subr.bf16.mxu0 0
    %222 = vmatpush2.bf16.msra.mxu0 0
    %223 = vmatprep.subr.bf16.mxu0 0
    %224 = vmatpush2.bf16.msra.mxu0 0
    %225 = vmatprep.subr.bf16.mxu0 0
    %226 = vmatpush2.bf16.msra.mxu0 0
    %227 = vmatprep.subr.bf16.mxu0 0
    %228 = vmatpush2.bf16.msra.mxu0 0
    %229 = vmatprep.subr.bf16.mxu0 0
    %230 = vmatpush2.bf16.msra.mxu0 0
    %231 = vmatprep.mubr.bf16.mxu0 0
    %232 = vmatmul.mubr.bf16.gmra.mxu0 %v198
    %v233 = vpop.f32.mrf.mxu0
    %v234 = vadd.f32 0.0, %v233
    %v235 = vpop.f32.mrf.mxu0
    %v236 = vpop.f32.mrf.mxu0
    %v237 = vpop.f32.mrf.mxu0
    %238 = vdwg.mxu0
    %vm239 = vcmp.ge.f32.partialorder %v234, 31.5
    %v240 = vlaneseq
    %v241 = vshrl.u32 %v240, 7
    %v242 = vsub.s32 0, %v241
    %v243 = vrot.slane %v190, %v242
    %v244 = vsel %vm239, %v243, %v188
    %v245 = vld [vmem:[#allocation5 + $0x2] sm:$0x1]
    %v246 = vld [vmem:[#allocation7 + $0x2] sm:$0x1]
    %v247 = vlaneseq
    %v248 = vshrl.u32 %v247, 7
    %v249 = vsub.s32 0, %v248
    %v250 = vrot.slane %v245, %v249
    %vm251 = vcmp.eq.f32.partialorder %v244, %v250
    %v252 = vsel %vm251, 1, 0
    %v253 = vcvt.s32.f32 %v252
    %v254 = vpack.c.bf16 %v253, %v253
    %255 = vmatprep.subr.bf16.mxu0 0
    %256 = vmatpush1.bf16.msra.mxu0 %v134
    %257 = vmatprep.subr.bf16.mxu0 0
    %258 = vmatpush1.bf16.msra.mxu0 %v133
    %259 = vmatprep.subr.bf16.mxu0 0
    %260 = vmatpush1.bf16.msra.mxu0 %v132
    %261 = vmatprep.subr.bf16.mxu0 0
    %262 = vmatpush1.bf16.msra.mxu0 %v131
    %263 = vmatprep.subr.bf16.mxu0 0
    %264 = vmatpush1.bf16.msra.mxu0 %v130
    %265 = vmatprep.subr.bf16.mxu0 0
    %266 = vmatpush1.bf16.msra.mxu0 %v129
    %267 = vmatprep.subr.bf16.mxu0 0
    %268 = vmatpush1.bf16.msra.mxu0 %v128
    %269 = vmatprep.subr.bf16.mxu0 0
    %270 = vmatpush1.bf16.msra.mxu0 %v127
    %271 = vmatprep.subr.bf16.mxu0 0
    %272 = vmatpush2.bf16.msra.mxu0 0
    %273 = vmatprep.subr.bf16.mxu0 0
    %274 = vmatpush2.bf16.msra.mxu0 0
    %275 = vmatprep.subr.bf16.mxu0 0
    %276 = vmatpush2.bf16.msra.mxu0 0
    %277 = vmatprep.subr.bf16.mxu0 0
    %278 = vmatpush2.bf16.msra.mxu0 0
    %279 = vmatprep.subr.bf16.mxu0 0
    %280 = vmatpush2.bf16.msra.mxu0 0
    %281 = vmatprep.subr.bf16.mxu0 0
    %282 = vmatpush2.bf16.msra.mxu0 0
    %283 = vmatprep.subr.bf16.mxu0 0
    %284 = vmatpush2.bf16.msra.mxu0 0
    %285 = vmatprep.subr.bf16.mxu0 0
    %286 = vmatpush2.bf16.msra.mxu0 0
    %287 = vmatprep.mubr.bf16.mxu0 0
    %288 = vmatmul.mubr.bf16.gmra.mxu0 %v254
    %v289 = vpop.f32.mrf.mxu0
    %v290 = vadd.f32 0.0, %v289
    %v291 = vpop.f32.mrf.mxu0
    %v292 = vpop.f32.mrf.mxu0
    %v293 = vpop.f32.mrf.mxu0
    %294 = vdwg.mxu0
    %vm295 = vcmp.ge.f32.partialorder %v290, 31.5
    %v296 = vlaneseq
    %v297 = vshrl.u32 %v296, 7
    %v298 = vsub.s32 0, %v297
    %v299 = vrot.slane %v246, %v298
    %v300 = vsel %vm295, %v299, %v244
    %v301 = vld [vmem:[#allocation5 + $0x3] sm:$0x1]
    %v302 = vld [vmem:[#allocation7 + $0x3] sm:$0x1]
    %v303 = vlaneseq
    %v304 = vshrl.u32 %v303, 7
    %v305 = vsub.s32 0, %v304
    %v306 = vrot.slane %v301, %v305
    %vm307 = vcmp.eq.f32.partialorder %v300, %v306
    %v308 = vsel %vm307, 1, 0
    %v309 = vcvt.s32.f32 %v308
    %v310 = vpack.c.bf16 %v309, %v309
    %311 = vmatprep.subr.bf16.mxu0 0
    %312 = vmatpush1.bf16.msra.mxu0 %v134
    %313 = vmatprep.subr.bf16.mxu0 0
    %314 = vmatpush1.bf16.msra.mxu0 %v133
    %315 = vmatprep.subr.bf16.mxu0 0
    %316 = vmatpush1.bf16.msra.mxu0 %v132
    %317 = vmatprep.subr.bf16.mxu0 0
    %318 = vmatpush1.bf16.msra.mxu0 %v131
    %319 = vmatprep.subr.bf16.mxu0 0
    %320 = vmatpush1.bf16.msra.mxu0 %v130
    %321 = vmatprep.subr.bf16.mxu0 0
    %322 = vmatpush1.bf16.msra.mxu0 %v129
    %323 = vmatprep.subr.bf16.mxu0 0
    %324 = vmatpush1.bf16.msra.mxu0 %v128
    %325 = vmatprep.subr.bf16.mxu0 0
    %326 = vmatpush1.bf16.msra.mxu0 %v127
    %327 = vmatprep.subr.bf16.mxu0 0
    %328 = vmatpush2.bf16.msra.mxu0 0
    %329 = vmatprep.subr.bf16.mxu0 0
    %330 = vmatpush2.bf16.msra.mxu0 0
    %331 = vmatprep.subr.bf16.mxu0 0
    %332 = vmatpush2.bf16.msra.mxu0 0
    %333 = vmatprep.subr.bf16.mxu0 0
    %334 = vmatpush2.bf16.msra.mxu0 0
    %335 = vmatprep.subr.bf16.mxu0 0
    %336 = vmatpush2.bf16.msra.mxu0 0
    %337 = vmatprep.subr.bf16.mxu0 0
    %338 = vmatpush2.bf16.msra.mxu0 0
    %339 = vmatprep.subr.bf16.mxu0 0
    %340 = vmatpush2.bf16.msra.mxu0 0
    %341 = vmatprep.subr.bf16.mxu0 0
    %342 = vmatpush2.bf16.msra.mxu0 0
    %343 = vmatprep.mubr.bf16.mxu0 0
    %344 = vmatmul.mubr.bf16.gmra.mxu0 %v310
    %v345 = vpop.f32.mrf.mxu0
    %v346 = vadd.f32 0.0, %v345
    %v347 = vpop.f32.mrf.mxu0
    %v348 = vpop.f32.mrf.mxu0
    %v349 = vpop.f32.mrf.mxu0
    %350 = vdwg.mxu0
    %vm351 = vcmp.ge.f32.partialorder %v346, 31.5
    %v352 = vlaneseq
    %v353 = vshrl.u32 %v352, 7
    %v354 = vsub.s32 0, %v353
    %v355 = vrot.slane %v302, %v354
    %v356 = vsel %vm351, %v355, %v300
    %357 = vst [vmem:[#allocation10] sm:$0xf] %v356
    // Predicated region
    $region34: #{tpu_custom_call.1} parent=1 // pred_check
      _
    $region35: #{tpu_custom_call.1} parent=1 // pred_check_branch
      %359 = sbr.rel (0) target = $region37
    $region36: #{tpu_custom_call.1} parent=1 // pred_region
      %s361 = ssub.s32 64, 64
      %362 = vsyncadd [#allocation4], %s361
      %s364 = sshll.u32 [#allocation10], 4
      %s365 = int_to_ptr.vmem [resolvable:$true] %s364
      %367 = dma.vmem_to_hbm [thread:$0]  %s365, 64, %s4, [#allocation4]
    $region37: #{tpu_custom_call.1} parent=1 // pred_fallthru
      _
    // Predicated region
    $region38: #{tpu_custom_call.1} parent=1 // pred_check
      _
    $region39: #{tpu_custom_call.1} parent=1 // pred_check_branch
      %369 = sbr.rel (0) target = $region41
    $region40: #{tpu_custom_call.1} parent=1 // pred_region
      %370 = dma.done [#allocation4], 64
    $region41: #{tpu_custom_call.1} parent=1 // pred_fallthru
      _
    %371 = vsyncpa [#allocation3], 1
    %372 = vsyncpa [#allocation6], 1
    %373 = vsyncpa [#allocation9], 1
    %374 = vsyncpa [#allocation4], 1

</llo_original>
